<compile_context>
chip_gen: v5e
topology: v5e:2x2
jax: 0.10.0
libtpu: 0.0.40
codegen_flags: <defaults>
</compile_context>

<pallas_src>
import functools

import jax
import jax.numpy as jnp
from jax.experimental import pallas as pl
from jax.experimental.pallas import tpu as pltpu

_LANE = 128


def _l1_partial_kernel(x_ref, acc_ref, *, tm, lane, valid_rows_last, needs_mask):
    """Accumulate sum(|x|) of one (tm, lane) block into a resident (8, lane) f32 block."""
    j = pl.program_id(0)

    @pl.when(j == 0)
    def _():
        acc_ref[...] = jnp.zeros_like(acc_ref)

    # |x| in the input dtype, accumulate in f32.
    vals = jnp.abs(x_ref[...]).astype(jnp.float32)

    def accumulate(v):
        # Fold (tm, lane) -> (8, lane) with pure VPU adds (no cross-lane reduce,
        # no SMEM scalar read-modify-write).  tm is always a multiple of 8 here.
        acc_ref[...] += v.reshape(tm // 8, 8, lane).sum(axis=0)

    if not needs_mask:
        # All blocks are full: cheapest possible path (abs + cast + adds only).
        accumulate(vals)
    else:
        is_tail = j == pl.num_programs(0) - 1

        @pl.when(jnp.logical_not(is_tail))
        def _():
            accumulate(vals)

        @pl.when(is_tail)
        def _():
            # Only the final (partial) block pays for the iota + select: rows past
            # the real data hold stale VMEM and must contribute zero.
            row = jax.lax.broadcasted_iota(jnp.int32, (tm, lane), 0)
            accumulate(jnp.where(row < valid_rows_last, vals, 0.0))


@functools.partial(jax.jit, static_argnames=("block_bytes", "min_kernel_bytes"))
def l1loss(x, block_bytes=4 * 1024 * 1024, min_kernel_bytes=256 * 1024):
    """mean(|x|) over all elements of x (matches torch.mean(torch.abs(x)))."""
    n = x.size
    itemsize = jnp.dtype(x.dtype).itemsize
    lane = _LANE

    rows_total = n // lane
    # Packed sublane multiple: 8 for 4-byte, 16 for 2-byte, 32 for 1-byte dtypes.
    sub = max(8, 32 // itemsize)

    # Fast path: tiny inputs (kernel launch + per-step overhead dominates), and we
    # also need at least `sub` full 128-lanes rows to form a legal block.
    if n * itemsize < min_kernel_bytes or rows_total < sub:
        return jnp.mean(jnp.abs(x).astype(jnp.float32)).astype(x.dtype)

    flat = x.reshape(-1)
    full = rows_total * lane
    rem = n - full  # < 128 elements, handled in the wrapper (no full-array pad).

    x2d = (flat if rem == 0 else flat[:full]).reshape(rows_total, lane)

    # Row-tile sized by byte budget, rounded down to the packed sublane multiple,
    # never exceeding the (sublane-floored) number of rows.
    tm_budget = max(sub, (block_bytes // (lane * itemsize)) // sub * sub)
    tm = min(tm_budget, (rows_total // sub) * sub)

    blocks = pl.cdiv(rows_total, tm)
    valid_rows_last = rows_total - (blocks - 1) * tm
    needs_mask = valid_rows_last != tm
    # Covering sanity: every row is read exactly once; only the tail block is partial.
    assert (blocks - 1) * tm < rows_total <= blocks * tm
    assert tm % 8 == 0

    kernel = functools.partial(
        _l1_partial_kernel,
        tm=tm, lane=lane, valid_rows_last=valid_rows_last, needs_mask=needs_mask)

    if blocks >= 3:
        # 3-deep pipeline: compute per block is ~3 ops/elem, so back-to-back DMAs
        # matter more than VMEM (3 x ~4 MiB fits under the 32 MiB limit below).
        in_spec = pl.BlockSpec((tm, lane), lambda j: (j, 0),
                               pipeline_mode=pl.Buffered(3))
    else:
        in_spec = pl.BlockSpec((tm, lane), lambda j: (j, 0))

    partial = pl.pallas_call(
        kernel,
        out_shape=jax.ShapeDtypeStruct((8, lane), jnp.float32),
        grid_spec=pltpu.PrefetchScalarGridSpec(
            num_scalar_prefetch=0,
            grid=(blocks,),
            in_specs=[in_spec],
            out_specs=pl.BlockSpec((8, lane), lambda j: (0, 0)),
        ),
        compiler_params=pltpu.CompilerParams(
            # Reduction axis: the output block stays resident as the accumulator.
            # Note: on v7x this single axis could be split 2-way with CORE_PARALLEL
            # to drive both TensorCores; kept single-axis here for portability.
            dimension_semantics=("arbitrary",),
            vmem_limit_bytes=32 * 1024 * 1024),
        cost_estimate=pl.CostEstimate(
            flops=2 * full,
            transcendentals=0,
            bytes_accessed=full * itemsize + 8 * lane * 4),
    )(x2d)

    total = jnp.sum(partial)
    if rem:
        total = total + jnp.sum(jnp.abs(flat[full:]).astype(jnp.float32))
    return (total / jnp.float32(n)).astype(x.dtype)


if __name__ == "__main__":
    key = jax.random.PRNGKey(0)
    k1, k2, k3 = jax.random.split(key, 3)

    # NCHW input consistent with the module's typical use.
    x = jax.random.normal(k1, (2, 4, 16, 16), dtype=jnp.float32)

    # Force the Pallas kernel path (default would take the small-input fast path).
    loss = l1loss(x, min_kernel_bytes=0)
    jax.block_until_ready(loss)
    ref = jnp.mean(jnp.abs(x))
    assert loss.shape == () and loss.dtype == x.dtype
    assert jnp.allclose(loss, ref, rtol=1e-6, atol=1e-6), (loss, ref)

    # Unaligned size: exercises the partial tail block + <128-element remainder path.
    y = jax.random.normal(k2, (3, 5, 7, 11), dtype=jnp.float32)  # 1155 elements
    loss_y = l1loss(y, min_kernel_bytes=0)
    ref_y = jnp.mean(jnp.abs(y))
    assert jnp.allclose(loss_y, ref_y, rtol=1e-6, atol=1e-6), (loss_y, ref_y)

    # bf16 input: exercises the dtype-aware (16, 128) sublane rounding.
    z = jax.random.normal(k3, (8, 4, 16, 32), dtype=jnp.bfloat16)
    loss_z = l1loss(z, min_kernel_bytes=0)
    ref_z = jnp.mean(jnp.abs(z).astype(jnp.float32)).astype(jnp.bfloat16)
    assert jnp.allclose(loss_z.astype(jnp.float32), ref_z.astype(jnp.float32),
                        rtol=1e-2, atol=1e-2), (loss_z, ref_z)

    # Default call (small input -> wrapper fast path) still matches.
    loss_fast = l1loss(x)
    assert jnp.allclose(loss_fast, ref, rtol=1e-6, atol=1e-6), (loss_fast, ref)

    jax.block_until_ready((loss, loss_y, loss_z, loss_fast))
    print("KERNEL_OK")
</pallas_src>

<mosaic_0001>
module attributes {stable_mosaic.version = 11 : i64} {
  func.func @_l1_partial_kernel(%arg0: i32, %arg1: memref<16x128xf32, #tpu.memory_space<vmem>>, %arg2: memref<8x128xf32, #tpu.memory_space<vmem>>) attributes {dimension_semantics = [#tpu.dimension_semantics<arbitrary>], iteration_bounds = array<i64: 1>, scalar_prefetch = 0 : i64, scratch_operands = 0 : i64, tpu.core_type = #tpu.core_type<tc>, window_params = [{transform_indices = @transform_0, window_bounds = array<i64: 16, 128>}, {pipeline_mode = #tpu.pipeline_mode<synchronous>, transform_indices = @transform_1, window_bounds = array<i64: 8, 128>}]} {
    %c0_i32 = arith.constant 0 : i32
    %0 = arith.cmpi eq, %arg0, %c0_i32 : i32
    %1 = arith.extui %0 : i1 to i32
    %c0_i32_0 = arith.constant 0 : i32
    %2 = arith.cmpi ne, %1, %c0_i32_0 : i32
    scf.if %2 {
      %cst_6 = arith.constant 0.000000e+00 : f32
      %10 = vector.broadcast %cst_6 : f32 to vector<8x128xf32>
      %c0_7 = arith.constant 0 : index
      %c0_8 = arith.constant 0 : index
      %11 = vector.load %arg2[%c0_7, %c0_8] : memref<8x128xf32, #tpu.memory_space<vmem>>, vector<8x128xf32>
      tpu.vector_store %arg2[%c0_7, %c0_8], %10 {strides = array<i32>} : memref<8x128xf32, #tpu.memory_space<vmem>>, vector<8x128xf32>,
    } else {
    }
    %c0 = arith.constant 0 : index
    %c0_1 = arith.constant 0 : index
    %3 = vector.load %arg1[%c0, %c0_1] : memref<16x128xf32, #tpu.memory_space<vmem>>, vector<16x128xf32>
    %4 = math.absf %3 : vector<16x128xf32>
    %c0_2 = arith.constant 0 : index
    %c0_3 = arith.constant 0 : index
    %5 = vector.load %arg2[%c0_2, %c0_3] : memref<8x128xf32, #tpu.memory_space<vmem>>, vector<8x128xf32>
    %6 = vector.shape_cast %4 : vector<16x128xf32> to vector<2x8x128xf32>
    %cst = arith.constant dense<0.000000e+00> : vector<8x128xf32>
    %7 = vector.multi_reduction <add>, %6, %cst [0] : vector<2x8x128xf32> to vector<8x128xf32>
    %8 = arith.addf %5, %7 : vector<8x128xf32>
    %c0_4 = arith.constant 0 : index
    %c0_5 = arith.constant 0 : index
    %9 = vector.load %arg2[%c0_4, %c0_5] : memref<8x128xf32, #tpu.memory_space<vmem>>, vector<8x128xf32>
    tpu.vector_store %arg2[%c0_4, %c0_5], %8 {strides = array<i32>} : memref<8x128xf32, #tpu.memory_space<vmem>>, vector<8x128xf32>,
    return
  }
  func.func @transform_0(%arg0: i32) -> (i32, i32) {
    %c0_i32 = arith.constant 0 : i32
    %c0_i32_0 = arith.constant 0 : i32
    return %arg0, %c0_i32 : i32, i32
  }
  func.func @transform_1(%arg0: i32) -> (i32, i32) {
    %c0_i32 = arith.constant 0 : i32
    %c0_i32_0 = arith.constant 0 : i32
    %c0_i32_1 = arith.constant 0 : i32
    return %c0_i32, %c0_i32_0 : i32, i32
  }
}

</mosaic_0001>

<llo_original>
// kernel: l1loss.1
$region0: #{l1loss.1}
  #allocation0 [shape = 'u32[]', space=smem, size = 0x4, offset = 0x4, fixed_abs, tag = 'smem constant byte address 0x4 - core index']
  #allocation1 [shape = 'u32[72,128]{1,0:T(1,128)}', space=vmem, size = 0x9000, scoped, tag = 'internal scratch']
  %s0 = inlined_call_operand.vmem [shape: f32[16,128], index: 0, kind: input, shape index: {}]
  %s1 = inlined_call_operand.vmem [shape: f32[8,128], index: 1, kind: output, shape index: {}]
  %s2 = sld [smem:[#allocation0]]
  $region18: #{l1loss.1} parent=0
    _
  %s4 = ssub.s32 1, %s2
  %s5 = scalar_select 0, %s4, %s2
  // Predicated region
  $region2: #{l1loss.1} parent=0 // pred_check
    _
  $region3: #{l1loss.1} parent=0 // pred_check_branch
    %7 = sbr.rel (0) target = $region5
  $region4: #{l1loss.1} parent=0 // pred_region
    _
  $region5: #{l1loss.1} parent=0 // pred_fallthru
    _
  %p8 = scmp.eq.s32.totalorder 0, 0
  // Predicated region
  $region6: #{l1loss.1} parent=0 // pred_check
    %p9 = pneg %p8
  $region7: #{l1loss.1} parent=0 // pred_check_branch
    %11 = sbr.rel (%p9) target = $region9
  $region8: #{l1loss.1} parent=0 // pred_region
    %12 = vst [vmem:[%s1] sm:$0xff] 0.0
  $region9: #{l1loss.1} parent=0 // pred_fallthru
    _
  %v13 = vld [vmem:[%s0] sm:$0xff]
  %v14 = vld [vmem:[%s0 + $0x8] sm:$0xff]
  %v15 = vand.u32 2147483647, %v13
  %v16 = vand.u32 2147483647, %v14
  %v17 = vld [vmem:[%s1] sm:$0xff]
  %v18 = vadd.f32 %v15, %v16
  %v19 = vadd.f32 %v17, %v18
  %20 = vst [vmem:[%s1] sm:$0xff] %v19
  // Predicated region
  $region10: #{l1loss.1} parent=0 // pred_check
    _
  $region11: #{l1loss.1} parent=0 // pred_check_branch
    %22 = sbr.rel (0) target = $region13
  $region12: #{l1loss.1} parent=0 // pred_region
    _
  $region13: #{l1loss.1} parent=0 // pred_fallthru
    _
  // Predicated region
  $region14: #{l1loss.1} parent=0 // pred_check
    _
  $region15: #{l1loss.1} parent=0 // pred_check_branch
    %24 = sbr.rel (0) target = $region17
  $region16: #{l1loss.1} parent=0 // pred_region
    _
  $region17: #{l1loss.1} parent=0 // pred_fallthru
    _

</llo_original>
